<compile_context>
chip_gen: v6e
topology: v6e:2x2x1
jax: 0.10.0
libtpu: 0.0.40
codegen_flags: <defaults>
</compile_context>

<pallas_src>
import functools

import numpy as np
import jax
import jax.numpy as jnp
from jax.experimental import pallas as pl
from jax.experimental.pallas import tpu as pltpu


def _round_up(x, m):
    return (x + m - 1) // m * m


def _choose_tiling(H, W, B, target_points):
    """Pick (tile_h, h_pad): rows per grid step covering ~target_points points."""
    target_rows = max(8, target_points // max(W, 1))
    h8 = _round_up(H, 8)

    # Tile heights that are multiples of 8, evenly tile h8, and fit the target budget.
    divs = [d for d in range(8, h8 + 1, 8) if h8 % d == 0 and d <= target_rows]
    if not divs:
        divs = [8]
    tile_h, h_pad = max(divs), h8

    # If the whole image fits in one target-sized tile, use the unpadded full-H block
    # (block dim == array dim satisfies the tiling rule; skips the pad + output slice),
    # unless B == 1 and we can cheaply split H for v7x megacore instead.
    if H <= target_rows and not (B == 1 and H >= 16 and H % 16 == 0):
        tile_h, h_pad = H, H

    # Keep >= 2 grid steps when B == 1 (v7x has 2 TensorCores; only parallel grid steps
    # shard across them).
    if B == 1 and h_pad // tile_h < 2:
        halves = [d for d in range(8, h_pad + 1, 8)
                  if h_pad % d == 0 and h_pad // d >= 2 and d <= target_rows]
        if halves:
            tile_h = max(halves)
    return tile_h, h_pad


def _backproject_kernel(invk_ref, depth_ref, out_ref):
    # invk_ref : (9,)             float32 in SMEM, row-major inv(K)[:3,:3]
    # depth_ref: (TILE_H, W)      float32
    # out_ref  : (3, TILE_H, W)   float32
    th, w = depth_ref.shape
    row0 = pl.program_id(1) * th
    # Pixel coords from iota: x = column index, y = global row index. No div/mod.
    x = jax.lax.broadcasted_iota(jnp.int32, (th, w), 1).astype(jnp.float32)
    y = (jax.lax.broadcasted_iota(jnp.int32, (th, w), 0) + row0).astype(jnp.float32)
    d = depth_ref[...]
    # cam_c = (invK[c,0]*x + invK[c,1]*y + invK[c,2]) * depth  — pure VPU FMAs.
    for c in range(3):
        k0 = invk_ref[3 * c + 0]
        k1 = invk_ref[3 * c + 1]
        k2 = invk_ref[3 * c + 2]
        out_ref[c, :, :] = (k0 * x + k1 * y + k2) * d


@functools.partial(jax.jit, static_argnames=("height", "width", "target_points"))
def backproject_cam_points(inv_K, depth, *, height, width, target_points=1 << 17):
    """cam_points[b, c, h*W+w] = depth[b, h, w] * (invK[c,0]*w + invK[c,1]*h + invK[c,2]).

    Args:
      inv_K: (3, 3) float32 inverse intrinsics.
      depth: (B, H, W) or (B, H*W) float32 depth.
      height, width: static image dims.
    Returns:
      (B, 3, H*W) float32 cam_points (same layout as the torch module).
    """
    H, W = int(height), int(width)
    B = depth.shape[0]
    depth_hw = depth.reshape(B, H, W).astype(jnp.float32)

    tile_h, h_pad = _choose_tiling(H, W, B, int(target_points))
    if h_pad != H:
        # Only hit when H is not a multiple of 8 and the image needs multiple H-tiles.
        depth_hw = jnp.pad(depth_hw, ((0, 0), (0, h_pad - H), (0, 0)))

    invk_flat = inv_K.reshape(-1).astype(jnp.float32)   # (9,) -> SMEM scalar prefetch

    n_points = B * H * W
    cost = pl.CostEstimate(flops=18 * n_points, transcendentals=0,
                           bytes_accessed=16 * n_points)

    out = pl.pallas_call(
        _backproject_kernel,
        out_shape=jax.ShapeDtypeStruct((B, 3, h_pad, W), jnp.float32),
        grid_spec=pltpu.PrefetchScalarGridSpec(
            num_scalar_prefetch=1,
            grid=(B, h_pad // tile_h),
            in_specs=[
                pl.BlockSpec((pl.Squeezed(), tile_h, W),
                             lambda b, i, invk: (b, i, 0)),
            ],
            out_specs=pl.BlockSpec((pl.Squeezed(), 3, tile_h, W),
                                   lambda b, i, invk: (b, 0, i, 0)),
        ),
        compiler_params=pltpu.CompilerParams(
            dimension_semantics=("parallel", "parallel")),
        cost_estimate=cost,
    )(invk_flat, depth_hw)

    if h_pad != H:
        out = out[:, :, :H, :]
    # Contiguous reshape back to the torch module's (B, 3, N) layout (free).
    # Note: output stays float32; a bf16 output would cut HBM traffic ~37% but changes
    # numerics, so it is not the default here.
    return out.reshape(B, 3, H * W)


class BackprojectDepthPallas:
    """JAX/Pallas re-implementation of the torch BackprojectDepth module."""

    def __init__(self, batch_size, height, width):
        self.batch_size = batch_size
        self.height = height
        self.width = width

    def forward(self, depth, K):
        # depth: numpy (B, H, W); K: numpy (3, 3)
        inv_K = np.linalg.inv(np.asarray(K, dtype=np.float64))[:3, :3].astype(np.float32)
        depth_np = np.asarray(depth, dtype=np.float32).reshape(
            self.batch_size, self.height, self.width)
        # The torch module computes all batches but only returns cam_points[0];
        # only batch 0 is launched on TPU.
        depth0 = jnp.asarray(depth_np[:1])

        cam = backproject_cam_points(jnp.asarray(inv_K), depth0,
                                     height=self.height, width=self.width)
        cam = jax.block_until_ready(cam)           # (1, 3, N)

        cam0 = np.asarray(cam[0]).T                # (N, 3), same as torch transpose(0, 1)
        # TODO(synk): z > 0 boolean filter has a data-dependent output shape (no static
        # Pallas equivalent); applied on host exactly like the torch module.
        return cam0[cam0[:, 2] > 0, :]

    __call__ = forward


def _reference_cam_points(depth, K, B, H, W):
    inv_K = np.linalg.inv(np.asarray(K, dtype=np.float64))[:3, :3].astype(np.float32)
    xs, ys = np.meshgrid(np.arange(W), np.arange(H), indexing="xy")
    pix = np.stack(
        [xs.reshape(-1), ys.reshape(-1), np.ones(H * W)], axis=0
    ).astype(np.float32)                            # (3, N)
    cam = inv_K @ pix                               # (3, N)
    d = np.asarray(depth, dtype=np.float32).reshape(B, 1, -1)
    return d * cam[None]                            # (B, 3, N)


if __name__ == "__main__":
    B, H, W = 2, 16, 16  # N = 256

    key = jax.random.PRNGKey(0)
    # depth with mixed signs so the z > 0 filter is exercised
    depth = np.asarray(jax.random.normal(key, (B, H, W), dtype=jnp.float32)) + 0.5

    # deterministic pinhole intrinsics
    K = np.eye(3, dtype=np.float32)
    K[0, 0] = 10.0   # fx
    K[1, 1] = 12.0   # fy
    K[0, 2] = 7.5    # cx
    K[1, 2] = 7.5    # cy

    module = BackprojectDepthPallas(B, H, W)
    out = module(depth, K)

    ref_cam = _reference_cam_points(depth, K, B, H, W)
    cam0 = ref_cam[0].T
    ref = cam0[cam0[:, 2] > 0, :]
    assert out.shape == ref.shape, (out.shape, ref.shape)
    np.testing.assert_allclose(out, ref, rtol=1e-5, atol=1e-5)

    inv_K_np = np.linalg.inv(np.asarray(K, dtype=np.float64))[:3, :3].astype(np.float32)
    invK = jnp.asarray(inv_K_np)

    # Check 2: full batch, W not a multiple of 128 and H not a multiple of 8
    # (exercises the unpadded full-H single-tile path).
    H2, W2 = 13, 20
    d2 = np.asarray(jax.random.normal(jax.random.PRNGKey(1), (B, H2, W2),
                                      dtype=jnp.float32)) + 0.5
    cam2 = np.asarray(jax.block_until_ready(
        backproject_cam_points(invK, jnp.asarray(d2), height=H2, width=W2)))
    np.testing.assert_allclose(cam2, _reference_cam_points(d2, K, B, H2, W2),
                               rtol=1e-5, atol=1e-5)

    # Check 3: multi-tile path with H padding + row offsets (forced by a tiny per-step
    # point budget), B == 1 so the >=2-parallel-steps logic is also exercised.
    H3, W3 = 20, 16
    d3 = np.asarray(jax.random.normal(jax.random.PRNGKey(2), (1, H3, W3),
                                      dtype=jnp.float32)) + 0.5
    cam3 = np.asarray(jax.block_until_ready(
        backproject_cam_points(invK, jnp.asarray(d3), height=H3, width=W3,
                               target_points=160)))
    np.testing.assert_allclose(cam3, _reference_cam_points(d3, K, 1, H3, W3),
                               rtol=1e-5, atol=1e-5)

    print("KERNEL_OK")
</pallas_src>

<mosaic_0001>
module attributes {stable_mosaic.version = 11 : i64} {
  func.func @_backproject_kernel(%arg0: i32, %arg1: i32, %arg2: memref<9xf32, #tpu.memory_space<smem>>, %arg3: memref<1x8x16xf32, #tpu.memory_space<vmem>>, %arg4: memref<1x3x8x16xf32, #tpu.memory_space<vmem>>) attributes {dimension_semantics = [#tpu.dimension_semantics<parallel>, #tpu.dimension_semantics<parallel>], iteration_bounds = array<i64: 1, 2>, scalar_prefetch = 1 : i64, scratch_operands = 0 : i64, tpu.core_type = #tpu.core_type<tc>, window_params = [{transform_indices = @transform_0, window_bounds = array<i64: 1, 8, 16>}, {transform_indices = @transform_1, window_bounds = array<i64: 1, 3, 8, 16>}]} {
    %c8_i32 = arith.constant 8 : i32
    %0 = arith.muli %arg1, %c8_i32 : i32
    %1 = tpu.iota {dimensions = array<i32: 1>} : vector<8x16xi32>
    %2 = arith.sitofp %1 : vector<8x16xi32> to vector<8x16xf32>
    %3 = tpu.iota {dimensions = array<i32: 0>} : vector<8x16xi32>
    %4 = vector.broadcast %0 : i32 to vector<8x16xi32>
    %5 = arith.addi %3, %4 : vector<8x16xi32>
    %6 = arith.sitofp %5 : vector<8x16xi32> to vector<8x16xf32>
    %c0 = arith.constant 0 : index
    %c0_0 = arith.constant 0 : index
    %c0_1 = arith.constant 0 : index
    %7 = vector.load %arg3[%c0, %c0_0, %c0_1] : memref<1x8x16xf32, #tpu.memory_space<vmem>>, vector<1x8x16xf32>
    %8 = vector.shape_cast %7 : vector<1x8x16xf32> to vector<8x16xf32>
    %c0_2 = arith.constant 0 : index
    %9 = memref.load %arg2[%c0_2] : memref<9xf32, #tpu.memory_space<smem>>
    %c1 = arith.constant 1 : index
    %10 = memref.load %arg2[%c1] : memref<9xf32, #tpu.memory_space<smem>>
    %c2 = arith.constant 2 : index
    %11 = memref.load %arg2[%c2] : memref<9xf32, #tpu.memory_space<smem>>
    %12 = vector.broadcast %9 : f32 to vector<8x16xf32>
    %13 = arith.mulf %12, %2 : vector<8x16xf32>
    %14 = vector.broadcast %10 : f32 to vector<8x16xf32>
    %15 = arith.mulf %14, %6 : vector<8x16xf32>
    %16 = arith.addf %13, %15 : vector<8x16xf32>
    %17 = vector.broadcast %11 : f32 to vector<8x16xf32>
    %18 = arith.addf %16, %17 : vector<8x16xf32>
    %19 = arith.mulf %18, %8 : vector<8x16xf32>
    %c0_3 = arith.constant 0 : index
    %c0_4 = arith.constant 0 : index
    %c0_5 = arith.constant 0 : index
    %c0_6 = arith.constant 0 : index
    %20 = vector.load %arg4[%c0_3, %c0_4, %c0_5, %c0_6] : memref<1x3x8x16xf32, #tpu.memory_space<vmem>>, vector<1x1x8x16xf32>
    %21 = vector.shape_cast %20 : vector<1x1x8x16xf32> to vector<8x16xf32>
    %22 = vector.shape_cast %19 : vector<8x16xf32> to vector<1x1x8x16xf32>
    tpu.vector_store %arg4[%c0_3, %c0_4, %c0_5, %c0_6], %22 {strides = array<i32>} : memref<1x3x8x16xf32, #tpu.memory_space<vmem>>, vector<1x1x8x16xf32>,
    %c3 = arith.constant 3 : index
    %23 = memref.load %arg2[%c3] : memref<9xf32, #tpu.memory_space<smem>>
    %c4 = arith.constant 4 : index
    %24 = memref.load %arg2[%c4] : memref<9xf32, #tpu.memory_space<smem>>
    %c5 = arith.constant 5 : index
    %25 = memref.load %arg2[%c5] : memref<9xf32, #tpu.memory_space<smem>>
    %26 = vector.broadcast %23 : f32 to vector<8x16xf32>
    %27 = arith.mulf %26, %2 : vector<8x16xf32>
    %28 = vector.broadcast %24 : f32 to vector<8x16xf32>
    %29 = arith.mulf %28, %6 : vector<8x16xf32>
    %30 = arith.addf %27, %29 : vector<8x16xf32>
    %31 = vector.broadcast %25 : f32 to vector<8x16xf32>
    %32 = arith.addf %30, %31 : vector<8x16xf32>
    %33 = arith.mulf %32, %8 : vector<8x16xf32>
    %c0_7 = arith.constant 0 : index
    %c1_8 = arith.constant 1 : index
    %c0_9 = arith.constant 0 : index
    %c0_10 = arith.constant 0 : index
    %34 = vector.load %arg4[%c0_7, %c1_8, %c0_9, %c0_10] : memref<1x3x8x16xf32, #tpu.memory_space<vmem>>, vector<1x1x8x16xf32>
    %35 = vector.shape_cast %34 : vector<1x1x8x16xf32> to vector<8x16xf32>
    %36 = vector.shape_cast %33 : vector<8x16xf32> to vector<1x1x8x16xf32>
    tpu.vector_store %arg4[%c0_7, %c1_8, %c0_9, %c0_10], %36 {strides = array<i32>} : memref<1x3x8x16xf32, #tpu.memory_space<vmem>>, vector<1x1x8x16xf32>,
    %c6 = arith.constant 6 : index
    %37 = memref.load %arg2[%c6] : memref<9xf32, #tpu.memory_space<smem>>
    %c7 = arith.constant 7 : index
    %38 = memref.load %arg2[%c7] : memref<9xf32, #tpu.memory_space<smem>>
    %c8 = arith.constant 8 : index
    %39 = memref.load %arg2[%c8] : memref<9xf32, #tpu.memory_space<smem>>
    %40 = vector.broadcast %37 : f32 to vector<8x16xf32>
    %41 = arith.mulf %40, %2 : vector<8x16xf32>
    %42 = vector.broadcast %38 : f32 to vector<8x16xf32>
    %43 = arith.mulf %42, %6 : vector<8x16xf32>
    %44 = arith.addf %41, %43 : vector<8x16xf32>
    %45 = vector.broadcast %39 : f32 to vector<8x16xf32>
    %46 = arith.addf %44, %45 : vector<8x16xf32>
    %47 = arith.mulf %46, %8 : vector<8x16xf32>
    %c0_11 = arith.constant 0 : index
    %c2_12 = arith.constant 2 : index
    %c0_13 = arith.constant 0 : index
    %c0_14 = arith.constant 0 : index
    %48 = vector.load %arg4[%c0_11, %c2_12, %c0_13, %c0_14] : memref<1x3x8x16xf32, #tpu.memory_space<vmem>>, vector<1x1x8x16xf32>
    %49 = vector.shape_cast %48 : vector<1x1x8x16xf32> to vector<8x16xf32>
    %50 = vector.shape_cast %47 : vector<8x16xf32> to vector<1x1x8x16xf32>
    tpu.vector_store %arg4[%c0_11, %c2_12, %c0_13, %c0_14], %50 {strides = array<i32>} : memref<1x3x8x16xf32, #tpu.memory_space<vmem>>, vector<1x1x8x16xf32>,
    return
  }
  func.func @transform_0(%arg0: i32, %arg1: i32, %arg2: memref<9xf32, #tpu.memory_space<smem>>) -> (i32, i32, i32) {
    %c0_i32 = arith.constant 0 : i32
    %c0_i32_0 = arith.constant 0 : i32
    return %arg0, %arg1, %c0_i32 : i32, i32, i32
  }
  func.func @transform_1(%arg0: i32, %arg1: i32, %arg2: memref<9xf32, #tpu.memory_space<smem>>) -> (i32, i32, i32, i32) {
    %c0_i32 = arith.constant 0 : i32
    %c0_i32_0 = arith.constant 0 : i32
    %c0_i32_1 = arith.constant 0 : i32
    return %arg0, %c0_i32, %arg1, %c0_i32_0 : i32, i32, i32, i32
  }
}

</mosaic_0001>

<llo_original>
// kernel: backproject_cam_points.1
$region0: #{backproject_cam_points.1}
  #allocation0 [shape = 'u32[]', space=smem, size = 0x4, offset = 0x4, fixed_abs, tag = 'smem constant byte address 0x4 - core index']
  #allocation1 [shape = 'u32[144,128]{1,0:T(1,128)}', space=vmem, size = 0x12000, scoped, tag = 'internal scratch']
  #allocation2 [shape = 's32[1]{0}', space=sflag, size = 0x4, scoped, tag = 'scoped memory for backproject_cam_points.1']
  #allocation3 [shape = 'u8[512]{0}', space=smem, size = 0x200, scoped, tag = 'prefetched SMEM operand 0']
  %s0 = inlined_call_operand.vmem [shape: f32[9], index: 0, kind: input, shape index: {}]
  %s1 = inlined_call_operand.hbm [shape: f32[1,16,16], index: 1, kind: input, shape index: {}]
  %s2 = inlined_call_operand.vmem [shape: f32[1,3,16,16], index: 2, kind: output, shape index: {}]
  %s3 = sld [smem:[#allocation0]]
  $region75: #{backproject_cam_points.1} parent=0
    _
  %s5 = ssub.s32 1, %s3
  %s6 = scalar_select 0, %s5, %s3
  %s7 = sshll.u32 %s0, 4
  %s8 = int_to_ptr.vmem [resolvable:$true] %s7
  %10 = dma.vmem_to_smem %s8, 16, [#allocation3], [#allocation2]
  %11 = dma.done [#allocation2], 16
  %12 = sfence
  $region1: #{backproject_cam_points.1} parent=0
    #allocation4 [shape = 'u8[8192]{0}', space=vmem, size = 0x2000, scoped, tag = 'input window, operand 1']
    #allocation5 [shape = 's32[2]{0}', space=sflag, size = 0x8, scoped, tag = 'scoped memory for backproject_cam_points.1']
    #allocation6 [shape = 'u8[24576]{0}', space=vmem, size = 0x6000, scoped, tag = 'output window, operand 0']
    %13 = vsyncpa [#allocation5], 0
    %s14 = scalar_lea.sflag [#allocation5], 1
    %15 = vsyncpa %s14, 0
    loop: start=0, step=1, limit=4
    $region2: #{backproject_cam_points.1} parent=1 // loop_pre_header
      _
    $region3: #{backproject_cam_points.1} parent=1 // loop_header
      %s17 = sphi 0, %s21
      %p18 = scmp.ge.s32.totalorder %s17, 4
      %s24 = sphi 0, %s36
      %s25 = sphi 0, %s32
      %s26 = sphi 0, %s24
      %s27 = sphi 0, %s25
      %s28 = sphi 0, %s26
      %s29 = sphi 0, %s27
      %s41 = sphi 0, %s43
      %s44 = sphi 0, %s41
      %s45 = sphi 0, %s44
      %s61 = sphi 0, %s45
      %s69 = sphi 0, %s71
      %s72 = sphi 0, %s69
      %s73 = sphi 0, %s72
      %s89 = sphi 0, %s73
    $region4: #{backproject_cam_points.1} parent=1 // loop_header_branch
      %20 = sbr.rel (%p18) target = $region8
    $region5: #{backproject_cam_points.1} parent=1 // loop_body
      %s22 = ssub.s32 %s17, 1
      %s23 = ssub.s32 %s17, 2
      %s30 = sadd.s32 1, %s25
      %p31 = scmp.ge.s32.totalorder %s30, 2
      %s32 = scalar_select %p31, 0, %s30
      %s33 = sadd.s32 1, %s24
      %s34 = scalar_select %p31, %s33, %s24
      %p35 = scmp.ge.s32.totalorder %s34, 1
      %s36 = scalar_select %p35, 0, %s34
      %s37 = ssub.s32 %s24, %s36
      %s38 = ssub.s32 %s25, %s32
      %s39 = sor.u32 %s37, %s38
      %p40 = scmp.eq.s32.totalorder %s39, 0
      %s42 = sadd.s32 %s41, 1
      %s43 = scalar_select %p40, %s41, %s42
      %p46 = pneg %p40
      %p47 = scmp.eq.s32.totalorder %s17, 1
      %p48 = por %p46, %p47
      %p49 = scmp.ne.s32.totalorder %s41, %s44
      %p50 = scmp.eq.s32.totalorder %s17, 0
      %p51 = por %p49, %p50
      %p52 = scmp.ne.s32.totalorder %s41, %s44
      %p53 = scmp.eq.s32.totalorder %s22, 1
      %p54 = por %p52, %p53
      %p55 = scmp.ne.s32.totalorder %s44, %s45
      %p56 = scmp.eq.s32.totalorder %s22, 0
      %p57 = por %p55, %p56
      %p58 = scmp.ne.s32.totalorder %s44, %s45
      %p59 = scmp.eq.s32.totalorder %s23, 1
      %p60 = por %p58, %p59
      %p62 = scmp.ne.s32.totalorder %s45, %s61
      %p63 = scmp.eq.s32.totalorder %s23, 0
      %p64 = por %p62, %p63
      %s65 = ssub.s32 %s24, %s36
      %s66 = ssub.s32 %s25, %s32
      %s67 = sor.u32 %s65, %s66
      %p68 = scmp.eq.s32.totalorder %s67, 0
      %s70 = sadd.s32 %s69, 1
      %s71 = scalar_select %p68, %s69, %s70
      %p74 = pneg %p68
      %p75 = scmp.eq.s32.totalorder %s17, 1
      %p76 = por %p74, %p75
      %p77 = scmp.ne.s32.totalorder %s69, %s72
      %p78 = scmp.eq.s32.totalorder %s17, 0
      %p79 = por %p77, %p78
      %p80 = scmp.ne.s32.totalorder %s69, %s72
      %p81 = scmp.eq.s32.totalorder %s22, 1
      %p82 = por %p80, %p81
      %p83 = scmp.ne.s32.totalorder %s72, %s73
      %p84 = scmp.eq.s32.totalorder %s22, 0
      %p85 = por %p83, %p84
      %p86 = scmp.ne.s32.totalorder %s72, %s73
      %p87 = scmp.eq.s32.totalorder %s23, 1
      %p88 = por %p86, %p87
      %p90 = scmp.ne.s32.totalorder %s73, %s89
      %p91 = scmp.eq.s32.totalorder %s23, 0
      %p92 = por %p90, %p91
      %p93 = scmp.le.s32.totalorder 1, %s17
      %p94 = scmp.lt.s32.totalorder %s17, 3
      %p95 = pnand %p93, %p94
      %p96 = pneg %p95
      // Predicated region
      $region9: #{backproject_cam_points.1} parent=5 // pred_check
        _
      $region10: #{backproject_cam_points.1} parent=5 // pred_check_branch
        %98 = sbr.rel (%p95) target = $region12
      $region11: #{backproject_cam_points.1} parent=5 // pred_region
        %s99 = ssub.s32 %s17, 1
      $region12: #{backproject_cam_points.1} parent=5 // pred_fallthru
        _
      %p100 = scmp.lt.s32.totalorder %s17, 2
      // Predicated region
      $region13: #{backproject_cam_points.1} parent=5 // pred_check
        %p101 = pneg %p100
      $region14: #{backproject_cam_points.1} parent=5 // pred_check_branch
        %103 = sbr.rel (%p101) target = $region16
      $region15: #{backproject_cam_points.1} parent=5 // pred_region
        // Predicated region
        $region17: #{backproject_cam_points.1} parent=15 // pred_check
          %p104 = pneg %p51
        $region18: #{backproject_cam_points.1} parent=15 // pred_check_branch
          %106 = sbr.rel (%p104) target = $region20
        $region19: #{backproject_cam_points.1} parent=15 // pred_region
          %s107 = sand.u32 %s41, 1
          %s108 = scalar_lea.sflag [#allocation5], %s107
          %s109 = sand.u32 %s41, 1
          %s110 = smul.addr %s109, 8
          %s111 = scalar_lea.vmem [#allocation4], %s110
          %s113 = ssub.s32 128, 128
          %114 = vsyncadd %s108, %s113
          %s115 = smul.addr %s24, 2
          %s116 = sadd.s32 %s25, %s115
          %s117 = smul.addr %s116, 128
          %s118 = scalar_lea.hbm %s1, %s117
          %s120 = sshll.u32 %s111, 4
          %s121 = int_to_ptr.vmem [resolvable:$true] %s120
          %123 = dma.hbm_to_vmem [thread:$0]  %s118, 128, %s121, %s108
        $region20: #{backproject_cam_points.1} parent=15 // pred_fallthru
          _
      $region16: #{backproject_cam_points.1} parent=5 // pred_fallthru
        _
      %p124 = scmp.le.s32.totalorder 1, %s17
      %p125 = scmp.lt.s32.totalorder %s17, 3
      %p126 = pnand %p124, %p125
      %p127 = pneg %p126
      // Predicated region
      $region21: #{backproject_cam_points.1} parent=5 // pred_check
        _
      $region22: #{backproject_cam_points.1} parent=5 // pred_check_branch
        %129 = sbr.rel (%p126) target = $region24
      $region23: #{backproject_cam_points.1} parent=5 // pred_region
        %s130 = ssub.s32 %s17, 1
        %s131 = sand.u32 %s44, 1
        %s132 = scalar_lea.sflag [#allocation5], %s131
        %s133 = sand.u32 %s44, 1
        %s134 = smul.addr %s133, 8
        %s135 = scalar_lea.vmem [#allocation4], %s134
        // Predicated region
        $region25: #{backproject_cam_points.1} parent=23 // pred_check
          %p136 = pneg %p57
        $region26: #{backproject_cam_points.1} parent=23 // pred_check_branch
          %138 = sbr.rel (%p136) target = $region28
        $region27: #{backproject_cam_points.1} parent=23 // pred_region
          %139 = dma.done %s132, 128
        $region28: #{backproject_cam_points.1} parent=23 // pred_fallthru
          _
        %s140 = sand.u32 %s44, 1
        %s141 = scalar_lea.sflag [#allocation5], %s140
        %s142 = sand.u32 %s44, 1
        %s143 = smul.addr %s142, 8
        %s144 = scalar_lea.vmem [#allocation4], %s143
        %p145 = pneg %p57
        %p146 = pneg %p54
        %p147 = pneg %p85
        %p148 = pneg %p82
        %s149 = sand.u32 %s72, 1
        %s150 = sand.u32 %s72, 1
        %s151 = smul.addr %s150, 24
        %s152 = scalar_lea.vmem [#allocation6], %s151
        %s153 = smul.u32 %s27, 8
        %v154 = vlaneseq
        %v155 = vand.u32 %v154, 127
        %v156 = vcvt.s32.f32 %v155
        %v157 = vlaneseq
        %v158 = vshrl.u32 %v157, 7
        %v159 = vstv %s153
        %v160 = vadd.s32 %v158, %v159
        %v161 = vcvt.s32.f32 %v160
        %v162 = vld [vmem:[%s135] sm:$0xff]
        %s163 = sld [smem:[#allocation3]]
        %s164 = sld [smem:[#allocation3 + $0x1]]
        %s165 = sld [smem:[#allocation3 + $0x2]]
        %v166 = vstv %s163
        %v167 = vmul.f32 %v166, %v156
        %v168 = vstv %s164
        %v169 = vmul.f32 %v168, %v161
        %v170 = vadd.f32 %v167, %v169
        %v171 = vstv %s165
        %v172 = vadd.f32 %v170, %v171
        %v173 = vmul.f32 %v172, %v162
        %vm174 = vcmask 130048
        %175 = vst.msk [vmem:[%s152] sm:$0xff] %vm174, %v173
        %s176 = sld [smem:[#allocation3 + $0x3]]
        %s177 = sld [smem:[#allocation3 + $0x4]]
        %s178 = sld [smem:[#allocation3 + $0x5]]
        %v179 = vstv %s176
        %v180 = vmul.f32 %v179, %v156
        %v181 = vstv %s177
        %v182 = vmul.f32 %v181, %v161
        %v183 = vadd.f32 %v180, %v182
        %v184 = vstv %s178
        %v185 = vadd.f32 %v183, %v184
        %v186 = vmul.f32 %v185, %v162
        %s187 = scalar_lea.vmem %s152, 8 [#allocation6]
        %188 = vst.msk [vmem:[%s187] sm:$0xff] %vm174, %v186
        %s189 = sld [smem:[#allocation3 + $0x6]]
        %s190 = sld [smem:[#allocation3 + $0x7]]
        %s191 = sld [smem:[#allocation3 + $0x8]]
        %v192 = vstv %s189
        %v193 = vmul.f32 %v192, %v156
        %v194 = vstv %s190
        %v195 = vmul.f32 %v194, %v161
        %v196 = vadd.f32 %v193, %v195
        %v197 = vstv %s191
        %v198 = vadd.f32 %v196, %v197
        %v199 = vmul.f32 %v198, %v162
        %s200 = scalar_lea.vmem %s152, 16 [#allocation6]
        %201 = vst.msk [vmem:[%s200] sm:$0xff] %vm174, %v199
        %s202 = sand.u32 %s72, 1
        %s203 = sand.u32 %s72, 1
        %s204 = smul.addr %s203, 24
        %s205 = scalar_lea.vmem [#allocation6], %s204
        // Predicated region
        $region29: #{backproject_cam_points.1} parent=23 // pred_check
          %p206 = pneg %p82
        $region30: #{backproject_cam_points.1} parent=23 // pred_check_branch
          %208 = sbr.rel (%p206) target = $region32
        $region31: #{backproject_cam_points.1} parent=23 // pred_region
          %s209 = smul.addr %s26, 6
          %s210 = sadd.s32 %s27, %s209
          %s211 = smul.addr %s210, 8
          %s212 = scalar_lea.vmem %s2, %s211
          // Predicated region
          $region33: #{backproject_cam_points.1} parent=31 // pred_check
            _
          $region34: #{backproject_cam_points.1} parent=31 // pred_check_branch
            %214 = sbr.rel (0) target = $region36
          $region35: #{backproject_cam_points.1} parent=31 // pred_region
            // Predicated region
            $region37: #{backproject_cam_points.1} parent=35 // pred_check
              _
            $region38: #{backproject_cam_points.1} parent=35 // pred_check_branch
              %216 = sbr.rel (0) target = $region40
            $region39: #{backproject_cam_points.1} parent=35 // pred_region
              // Predicated region
              $region52: #{backproject_cam_points.1} parent=39 // pred_check
                _
              $region53: #{backproject_cam_points.1} parent=39 // pred_check_branch
                %236 = sbr.rel (0) target = $region55
              $region54: #{backproject_cam_points.1} parent=39 // pred_region
                loop: start=0, step=1, limit=1
                $region56: #{backproject_cam_points.1} parent=54 // loop_pre_header
                  _
                $region57: #{backproject_cam_points.1} parent=54 // loop_header
                  %s238 = sphi 0, %s242
                  %p239 = scmp.ge.s32.totalorder %s238, 1
                  %s243 = sphi %s205, %s205
                  %s244 = sphi %s212, %s212
                $region58: #{backproject_cam_points.1} parent=54 // loop_header_branch
                  %241 = sbr.rel (%p239) target = $region62
                $region59: #{backproject_cam_points.1} parent=54 // loop_body
                  %v245 = vld [vmem:[%s243] sm:$0xff]
                  %246 = vst [vmem:[%s244] sm:$0xff] %v245
                  %v247 = vld [vmem:[%s243 + $0x8] sm:$0xff]
                  %248 = vst [vmem:[%s244 + $0x10] sm:$0xff] %v247
                  %v249 = vld [vmem:[%s243 + $0x10] sm:$0xff]
                  %250 = vst [vmem:[%s244 + $0x20] sm:$0xff] %v249
                $region60: #{backproject_cam_points.1} parent=54 // loop_footer
                  %s242 = sadd.s32 1, %s238
                $region61: #{backproject_cam_points.1} parent=54 // loop_footer_branch
                  %237 = sbr.rel target = $region57
                $region62: #{backproject_cam_points.1} parent=54 // loop_exit
                  _
              $region55: #{backproject_cam_points.1} parent=39 // pred_fallthru
                _
              // Predicated region
              $region63: #{backproject_cam_points.1} parent=39 // pred_check
                _
              $region64: #{backproject_cam_points.1} parent=39 // pred_check_branch
                %252 = sbr.rel target = $region66
              $region65: #{backproject_cam_points.1} parent=39 // pred_region
                _
              $region66: #{backproject_cam_points.1} parent=39 // pred_fallthru
                _
            $region40: #{backproject_cam_points.1} parent=35 // pred_fallthru
              _
            // Predicated region
            $region41: #{backproject_cam_points.1} parent=35 // pred_check
              _
            $region42: #{backproject_cam_points.1} parent=35 // pred_check_branch
              %218 = sbr.rel target = $region44
            $region43: #{backproject_cam_points.1} parent=35 // pred_region
              %s220 = ssub.s32 256, 1
              loop: start=0, step=1, limit=1
              $region45: #{backproject_cam_points.1} parent=43 // loop_pre_header
                _
              $region46: #{backproject_cam_points.1} parent=43 // loop_header
                %s222 = sphi 0, %s226
                %p223 = scmp.ge.s32.totalorder %s222, 1
                %s227 = sphi %s205, %s205
                %s228 = sphi %s212, %s212
              $region47: #{backproject_cam_points.1} parent=43 // loop_header_branch
                %225 = sbr.rel (%p223) target = $region51
              $region48: #{backproject_cam_points.1} parent=43 // loop_body
                %v229 = vld [vmem:[%s227] sm:%s220]
                %230 = vst [vmem:[%s228] sm:%s220] %v229
                %v231 = vld [vmem:[%s227 + $0x8] sm:%s220]
                %232 = vst [vmem:[%s228 + $0x10] sm:%s220] %v231
                %v233 = vld [vmem:[%s227 + $0x10] sm:%s220]
                %234 = vst [vmem:[%s228 + $0x20] sm:%s220] %v233
              $region49: #{backproject_cam_points.1} parent=43 // loop_footer
                %s226 = sadd.s32 1, %s222
              $region50: #{backproject_cam_points.1} parent=43 // loop_footer_branch
                %221 = sbr.rel target = $region46
              $region51: #{backproject_cam_points.1} parent=43 // loop_exit
                _
            $region44: #{backproject_cam_points.1} parent=35 // pred_fallthru
              _
          $region36: #{backproject_cam_points.1} parent=31 // pred_fallthru
            _
          %253 = vnop
        $region32: #{backproject_cam_points.1} parent=23 // pred_fallthru
          _
      $region24: #{backproject_cam_points.1} parent=5 // pred_fallthru
        _
      %p254 = scmp.le.s32.totalorder 2, %s17
      // Predicated region
      $region67: #{backproject_cam_points.1} parent=5 // pred_check
        %p255 = pneg %p254
      $region68: #{backproject_cam_points.1} parent=5 // pred_check_branch
        %257 = sbr.rel (%p255) target = $region70
      $region69: #{backproject_cam_points.1} parent=5 // pred_region
        %s258 = ssub.s32 %s17, 2
        // Predicated region
        $region71: #{backproject_cam_points.1} parent=69 // pred_check
          %p259 = pneg %p88
        $region72: #{backproject_cam_points.1} parent=69 // pred_check_branch
          %261 = sbr.rel (%p259) target = $region74
        $region73: #{backproject_cam_points.1} parent=69 // pred_region
          %s262 = sand.u32 %s73, 1
          %s263 = sand.u32 %s73, 1
          %s264 = smul.addr %s263, 24
          %s265 = scalar_lea.vmem [#allocation6], %s264
        $region74: #{backproject_cam_points.1} parent=69 // pred_fallthru
          _
      $region70: #{backproject_cam_points.1} parent=5 // pred_fallthru
        _
    $region6: #{backproject_cam_points.1} parent=1 // loop_footer
      %s21 = sadd.s32 1, %s17
    $region7: #{backproject_cam_points.1} parent=1 // loop_footer_branch
      %16 = sbr.rel target = $region3
    $region8: #{backproject_cam_points.1} parent=1 // loop_exit
      _
    %266 = vsyncpa [#allocation5], 1
    %s267 = scalar_lea.sflag [#allocation5], 1
    %268 = vsyncpa %s267, 1

</llo_original>
